<compile_context>
chip_gen: v7x
topology: tpu7x:2x2x1
jax: 0.10.0
libtpu: 0.0.40
codegen_flags: <defaults>
</compile_context>

<pallas_src>
import jax
import jax.numpy as jnp
from jax.experimental import pallas as pl
from jax.experimental.pallas import tpu as pltpu

# ---- config (mirrors the module __init__) ----------------------------------
EMBED_DIM = 16
HIDDEN = 32
NUM_LAYERS = 1
BIDIR = False
DIRECTION = 2 if BIDIR else 1
VOCAB = 64
SEQ = 8                               # both sentences use the same length here
INPUT_DIM = 2 * DIRECTION * HIDDEN    # classifier input dim  (= 64)
HID_MID = INPUT_DIM // 2              # classifier hidden dim (= 32)
OUT_PAD = 128                         # lane-padded logits width (== 4*HIDDEN)

# Weight-slab row layout (all segments 128 lanes wide, 8-row aligned offsets).
ROW_TAB = 0                           # (VOCAB, 4H)   fused embed+W_ih+bias
ROW_WHH = VOCAB                       # (H, 4H)       recurrent weights
ROW_WC = VOCAB + HIDDEN               # (2H, 128)     fused classifier weights
ROW_BC = VOCAB + 3 * HIDDEN           # (1, 128)      fused classifier bias
SLAB_ROWS = ((ROW_BC + 1 + 7) // 8) * 8   # = 168, padded to a multiple of 8


# ---- fused Pallas kernel -----------------------------------------------------
def siamese_kernel(tok_ref,        # (2S, 1) int32   VMEM   row 2t+si = sent si, step t
                   slab_ref,       # (168, 128) f32  VMEM   packed constant weights
                   h0_ref, c0_ref, # (2, H) f32      VMEM   rows = (s1, s2) state
                   out_ref):       # (1, 128) f32    VMEM   cols 0:2 are the logits
    S = SEQ
    H = HIDDEN
    V = VOCAB

    # Static slices into the packed weight slab (all 8-row aligned).
    tab = slab_ref[ROW_TAB:ROW_TAB + V, :]          # (V, 4H), LSTM bias folded in
    whh = slab_ref[ROW_WHH:ROW_WHH + H, :]          # (H, 4H)
    wc = slab_ref[ROW_WC:ROW_WC + 2 * H, :]         # (2H, 128)
    bc = slab_ref[ROW_BC:ROW_BC + 1, :]             # (1, 128)

    # ---- fused embedding + input projection: one-hot(tok) @ tab, one MXU op.
    iota = jax.lax.broadcasted_iota(jnp.int32, (2 * S, V), 1)
    onehot = (iota == tok_ref[...]).astype(jnp.float32)            # (2S, V)
    pre = jnp.dot(onehot, tab, preferred_element_type=jnp.float32)  # (2S, 4H)

    h = h0_ref[...]                                  # (2, H)  rows = s1, s2
    c = c0_ref[...]                                  # (2, H)

    # ---- fully-unrolled recurrence; both sentences ride as batch rows, so the
    # serial chain is S steps with a single (2,H)x(H,4H) matmul per step.
    # Gate order in the 4H axis is [i | f | o | g].
    for t in range(S):
        gates = (jnp.dot(h, whh, preferred_element_type=jnp.float32)
                 + pre[2 * t:2 * t + 2, :])          # (2, 4H)
        sig = jax.nn.sigmoid(gates[:, :3 * H])       # [i|f|o] one wide EUP push
        g_g = jnp.tanh(gates[:, 3 * H:])             # g
        c = sig[:, H:2 * H] * c + sig[:, :H] * g_g
        h = sig[:, 2 * H:3 * H] * jnp.tanh(c)

    # ---- fused classifier: cat(v1, v2) @ Wc + bc expressed as a sum of two
    # matmuls (no cross-lane concat); Wc/bc already fold both Linear layers.
    out_ref[...] = (jnp.dot(h[0:1, :], wc[0:H, :],
                            preferred_element_type=jnp.float32)
                    + jnp.dot(h[1:2, :], wc[H:2 * H, :],
                              preferred_element_type=jnp.float32)
                    + bc)                            # (1, 128), cols 0:2 real


# ---- wrapper -----------------------------------------------------------------
_VMEM = pl.BlockSpec(memory_space=pltpu.MemorySpace.VMEM)


@jax.jit
def siamese_forward(params, s1_tokens, s2_tokens, h1, c1, h2, c2):
    # Interleave the two sentences: row 2t+si holds sentence si's token at step t.
    tok = jnp.stack([s1_tokens, s2_tokens], axis=1).reshape(2 * SEQ, 1)
    tok = tok.astype(jnp.int32)
    h0 = jnp.stack([h1, h2])                                    # (2, H)
    c0 = jnp.stack([c1, c2])                                    # (2, H)

    out = pl.pallas_call(
        siamese_kernel,
        out_shape=jax.ShapeDtypeStruct((1, OUT_PAD), jnp.float32),
        in_specs=[_VMEM, _VMEM, _VMEM, _VMEM],
        out_specs=_VMEM,
    )(tok, params["slab"], h0, c0)

    return out[:, :2].reshape(1, 1, 2)        # matches torch (batch, seq=1, 2)


# ---- parameter construction / conversion from PyTorch layout -----------------
def init_torch_params(key):
    """Random params in the native PyTorch layouts (gate order [i,f,g,o])."""
    ks = jax.random.split(key, 9)
    s = 0.1
    return {
        "embedding": s * jax.random.normal(ks[0], (VOCAB, EMBED_DIM), jnp.float32),
        "w_ih": s * jax.random.normal(ks[1], (4 * HIDDEN, EMBED_DIM), jnp.float32),
        "w_hh": s * jax.random.normal(ks[2], (4 * HIDDEN, HIDDEN), jnp.float32),
        "b_ih": s * jax.random.normal(ks[3], (4 * HIDDEN,), jnp.float32),
        "b_hh": s * jax.random.normal(ks[4], (4 * HIDDEN,), jnp.float32),
        "w1": s * jax.random.normal(ks[5], (HID_MID, INPUT_DIM), jnp.float32),
        "b1": s * jax.random.normal(ks[6], (HID_MID,), jnp.float32),
        "w2": s * jax.random.normal(ks[7], (2, HID_MID), jnp.float32),
        "b2": s * jax.random.normal(ks[8], (2,), jnp.float32),
    }


def _reorder_gates(w):
    """PyTorch gate order [i,f,g,o] -> kernel order [i,f,o,g] (along dim 0)."""
    H = HIDDEN
    return jnp.concatenate([w[:2 * H], w[3 * H:4 * H], w[2 * H:3 * H]], axis=0)


def prepare_params(tp):
    """Fold / reorder / pack the PyTorch weights into the kernel's slab layout."""
    H = HIDDEN

    # LSTM weights in kernel layout (gate order [i,f,o,g], right-multiplied).
    w_ih_k = _reorder_gates(tp["w_ih"]).T                       # (E, 4H)
    w_hh_k = _reorder_gates(tp["w_hh"]).T                       # (H, 4H)
    b_k = _reorder_gates(tp["b_ih"] + tp["b_hh"]).reshape(1, 4 * H)

    # Fused embedding gather table with the LSTM bias folded in:
    #   pre[tok] = embedding[tok] @ W_ih^T + b   ==  one_hot(tok) @ tab
    tab = tp["embedding"] @ w_ih_k + b_k                        # (V, 4H)

    # Fold the two classifier Linears (no activation between them).
    wc = (tp["w2"] @ tp["w1"]).T                                # (2H, 2)
    bc = tp["w2"] @ tp["b1"] + tp["b2"]                         # (2,)
    wc_pad = jnp.zeros((2 * H, OUT_PAD), jnp.float32).at[:, :2].set(wc)
    bc_pad = jnp.zeros((1, OUT_PAD), jnp.float32).at[:, :2].set(bc.reshape(1, 2))

    # Pack everything into one (SLAB_ROWS, 128) constant slab.
    slab = jnp.zeros((SLAB_ROWS, OUT_PAD), jnp.float32)
    slab = slab.at[ROW_TAB:ROW_TAB + VOCAB, :].set(tab)
    slab = slab.at[ROW_WHH:ROW_WHH + H, :].set(w_hh_k)
    slab = slab.at[ROW_WC:ROW_WC + 2 * H, :].set(wc_pad)
    slab = slab.at[ROW_BC:ROW_BC + 1, :].set(bc_pad)
    return {"slab": slab}


# ---- pure-JAX reference (PyTorch-layout weights, PyTorch gate order) ----------
def reference_forward(tp, s1, s2, h1, c1, h2, c2):
    H = HIDDEN

    def cell(tok, h, c):
        x = tp["embedding"][tok]
        g = tp["w_ih"] @ x + tp["w_hh"] @ h + tp["b_ih"] + tp["b_hh"]
        i = jax.nn.sigmoid(g[0:H])
        f = jax.nn.sigmoid(g[H:2 * H])
        gg = jnp.tanh(g[2 * H:3 * H])
        o = jax.nn.sigmoid(g[3 * H:4 * H])
        c = f * c + i * gg
        return o * jnp.tanh(c), c

    for t in range(s1.shape[0]):
        h1, c1 = cell(s1[t], h1, c1)
    for t in range(s2.shape[0]):
        h2, c2 = cell(s2[t], h2, c2)
    feat = jnp.concatenate([h1, h2])
    hmid = tp["w1"] @ feat + tp["b1"]
    return (tp["w2"] @ hmid + tp["b2"]).reshape(1, 1, 2)


# ---- main ---------------------------------------------------------------------
if __name__ == "__main__":
    key = jax.random.PRNGKey(0)
    pkey, k1, k2, kh = jax.random.split(key, 4)
    tparams = init_torch_params(pkey)
    params = prepare_params(tparams)

    # Sentences as token-id sequences (the lists of tokens in the torch code).
    s1 = jax.random.randint(k1, (SEQ,), 0, VOCAB, dtype=jnp.int32)
    s2 = jax.random.randint(k2, (SEQ,), 0, VOCAB, dtype=jnp.int32)

    # initHiddenCell(): torch.randn -> deterministic normal here.
    kh1, kc1, kh2, kc2 = jax.random.split(kh, 4)
    h1 = jax.random.normal(kh1, (HIDDEN,), jnp.float32)
    c1 = jax.random.normal(kc1, (HIDDEN,), jnp.float32)
    h2 = jax.random.normal(kh2, (HIDDEN,), jnp.float32)
    c2 = jax.random.normal(kc2, (HIDDEN,), jnp.float32)

    out = siamese_forward(params, s1, s2, h1, c1, h2, c2)
    out = jax.block_until_ready(out)
    assert out.shape == (1, 1, 2) and out.dtype == jnp.float32

    ref = reference_forward(tparams, s1, s2, h1, c1, h2, c2)
    assert jnp.allclose(out, ref, atol=1e-5, rtol=1e-5), (out, ref)

    print("KERNEL_OK")
</pallas_src>

<mosaic_0001>
module attributes {stable_mosaic.version = 11 : i64} {
  func.func @siamese_kernel(%arg0: memref<16x1xi32, #tpu.memory_space<vmem>>, %arg1: memref<168x128xf32, #tpu.memory_space<vmem>>, %arg2: memref<2x32xf32, #tpu.memory_space<vmem>>, %arg3: memref<2x32xf32, #tpu.memory_space<vmem>>, %arg4: memref<1x128xf32, #tpu.memory_space<vmem>>) attributes {dimension_semantics = [], scalar_prefetch = 0 : i64, scratch_operands = 0 : i64, tpu.core_type = #tpu.core_type<tc>} {
    %c0 = arith.constant 0 : index
    %c0_0 = arith.constant 0 : index
    %0 = vector.load %arg1[%c0, %c0_0] : memref<168x128xf32, #tpu.memory_space<vmem>>, vector<64x128xf32>
    %c64 = arith.constant 64 : index
    %c0_1 = arith.constant 0 : index
    %1 = vector.load %arg1[%c64, %c0_1] : memref<168x128xf32, #tpu.memory_space<vmem>>, vector<32x128xf32>
    %c96 = arith.constant 96 : index
    %c0_2 = arith.constant 0 : index
    %2 = vector.load %arg1[%c96, %c0_2] : memref<168x128xf32, #tpu.memory_space<vmem>>, vector<64x128xf32>
    %c160 = arith.constant 160 : index
    %c0_3 = arith.constant 0 : index
    %3 = vector.load %arg1[%c160, %c0_3] : memref<168x128xf32, #tpu.memory_space<vmem>>, vector<1x128xf32>
    %4 = tpu.iota {dimensions = array<i32: 1>} : vector<16x64xi32>
    %c0_4 = arith.constant 0 : index
    %c0_5 = arith.constant 0 : index
    %5 = vector.load %arg0[%c0_4, %c0_5] : memref<16x1xi32, #tpu.memory_space<vmem>>, vector<16x1xi32>
    %6 = vector.broadcast %5 : vector<16x1xi32> to vector<16x64xi32>
    %7 = arith.cmpi eq, %4, %6 : vector<16x64xi32>
    %8 = arith.extui %7 : vector<16x64xi1> to vector<16x64xi32>
    %9 = arith.sitofp %8 : vector<16x64xi32> to vector<16x64xf32>
    %cst = arith.constant dense<0.000000e+00> : vector<16x128xf32>
    %10 = tpu.matmul %9, %0, %cst {dimension_numbers = #tpu.dot_dimension_numbers<[1], [0], [0], [1], [0, 0, 1, 1], [], []>} : vector<16x64xf32>, vector<64x128xf32>, vector<16x128xf32> -> vector<16x128xf32>
    %c0_6 = arith.constant 0 : index
    %c0_7 = arith.constant 0 : index
    %11 = vector.load %arg2[%c0_6, %c0_7] : memref<2x32xf32, #tpu.memory_space<vmem>>, vector<2x32xf32>
    %c0_8 = arith.constant 0 : index
    %c0_9 = arith.constant 0 : index
    %12 = vector.load %arg3[%c0_8, %c0_9] : memref<2x32xf32, #tpu.memory_space<vmem>>, vector<2x32xf32>
    %cst_10 = arith.constant dense<0.000000e+00> : vector<2x128xf32>
    %13 = tpu.matmul %11, %1, %cst_10 {dimension_numbers = #tpu.dot_dimension_numbers<[1], [0], [0], [1], [0, 0, 1, 1], [], []>} : vector<2x32xf32>, vector<32x128xf32>, vector<2x128xf32> -> vector<2x128xf32>
    %14 = vector.extract_strided_slice %10 {offsets = [0, 0], sizes = [2, 128], strides = [1, 1]} : vector<16x128xf32> to vector<2x128xf32>
    %15 = arith.addf %13, %14 : vector<2x128xf32>
    %16 = vector.extract_strided_slice %15 {offsets = [0, 0], sizes = [2, 96], strides = [1, 1]} : vector<2x128xf32> to vector<2x96xf32>
    %17 = arith.negf %16 : vector<2x96xf32>
    %18 = math.exp %17 : vector<2x96xf32>
    %cst_11 = arith.constant 1.000000e+00 : f32
    %19 = vector.broadcast %cst_11 : f32 to vector<2x96xf32>
    %20 = arith.addf %19, %18 : vector<2x96xf32>
    %21 = arith.divf %19, %20 : vector<2x96xf32>
    %22 = vector.extract_strided_slice %15 {offsets = [0, 96], sizes = [2, 32], strides = [1, 1]} : vector<2x128xf32> to vector<2x32xf32>
    %23 = math.tanh %22 : vector<2x32xf32>
    %24 = vector.extract_strided_slice %21 {offsets = [0, 32], sizes = [2, 32], strides = [1, 1]} : vector<2x96xf32> to vector<2x32xf32>
    %25 = arith.mulf %24, %12 : vector<2x32xf32>
    %26 = vector.extract_strided_slice %21 {offsets = [0, 0], sizes = [2, 32], strides = [1, 1]} : vector<2x96xf32> to vector<2x32xf32>
    %27 = arith.mulf %26, %23 : vector<2x32xf32>
    %28 = arith.addf %25, %27 : vector<2x32xf32>
    %29 = vector.extract_strided_slice %21 {offsets = [0, 64], sizes = [2, 32], strides = [1, 1]} : vector<2x96xf32> to vector<2x32xf32>
    %30 = math.tanh %28 : vector<2x32xf32>
    %31 = arith.mulf %29, %30 : vector<2x32xf32>
    %cst_12 = arith.constant dense<0.000000e+00> : vector<2x128xf32>
    %32 = tpu.matmul %31, %1, %cst_12 {dimension_numbers = #tpu.dot_dimension_numbers<[1], [0], [0], [1], [0, 0, 1, 1], [], []>} : vector<2x32xf32>, vector<32x128xf32>, vector<2x128xf32> -> vector<2x128xf32>
    %33 = vector.extract_strided_slice %10 {offsets = [2, 0], sizes = [2, 128], strides = [1, 1]} : vector<16x128xf32> to vector<2x128xf32>
    %34 = arith.addf %32, %33 : vector<2x128xf32>
    %35 = vector.extract_strided_slice %34 {offsets = [0, 0], sizes = [2, 96], strides = [1, 1]} : vector<2x128xf32> to vector<2x96xf32>
    %36 = arith.negf %35 : vector<2x96xf32>
    %37 = math.exp %36 : vector<2x96xf32>
    %cst_13 = arith.constant 1.000000e+00 : f32
    %38 = vector.broadcast %cst_13 : f32 to vector<2x96xf32>
    %39 = arith.addf %38, %37 : vector<2x96xf32>
    %40 = arith.divf %38, %39 : vector<2x96xf32>
    %41 = vector.extract_strided_slice %34 {offsets = [0, 96], sizes = [2, 32], strides = [1, 1]} : vector<2x128xf32> to vector<2x32xf32>
    %42 = math.tanh %41 : vector<2x32xf32>
    %43 = vector.extract_strided_slice %40 {offsets = [0, 32], sizes = [2, 32], strides = [1, 1]} : vector<2x96xf32> to vector<2x32xf32>
    %44 = arith.mulf %43, %28 : vector<2x32xf32>
    %45 = vector.extract_strided_slice %40 {offsets = [0, 0], sizes = [2, 32], strides = [1, 1]} : vector<2x96xf32> to vector<2x32xf32>
    %46 = arith.mulf %45, %42 : vector<2x32xf32>
    %47 = arith.addf %44, %46 : vector<2x32xf32>
    %48 = vector.extract_strided_slice %40 {offsets = [0, 64], sizes = [2, 32], strides = [1, 1]} : vector<2x96xf32> to vector<2x32xf32>
    %49 = math.tanh %47 : vector<2x32xf32>
    %50 = arith.mulf %48, %49 : vector<2x32xf32>
    %cst_14 = arith.constant dense<0.000000e+00> : vector<2x128xf32>
    %51 = tpu.matmul %50, %1, %cst_14 {dimension_numbers = #tpu.dot_dimension_numbers<[1], [0], [0], [1], [0, 0, 1, 1], [], []>} : vector<2x32xf32>, vector<32x128xf32>, vector<2x128xf32> -> vector<2x128xf32>
    %52 = vector.extract_strided_slice %10 {offsets = [4, 0], sizes = [2, 128], strides = [1, 1]} : vector<16x128xf32> to vector<2x128xf32>
    %53 = arith.addf %51, %52 : vector<2x128xf32>
    %54 = vector.extract_strided_slice %53 {offsets = [0, 0], sizes = [2, 96], strides = [1, 1]} : vector<2x128xf32> to vector<2x96xf32>
    %55 = arith.negf %54 : vector<2x96xf32>
    %56 = math.exp %55 : vector<2x96xf32>
    %cst_15 = arith.constant 1.000000e+00 : f32
    %57 = vector.broadcast %cst_15 : f32 to vector<2x96xf32>
    %58 = arith.addf %57, %56 : vector<2x96xf32>
    %59 = arith.divf %57, %58 : vector<2x96xf32>
    %60 = vector.extract_strided_slice %53 {offsets = [0, 96], sizes = [2, 32], strides = [1, 1]} : vector<2x128xf32> to vector<2x32xf32>
    %61 = math.tanh %60 : vector<2x32xf32>
    %62 = vector.extract_strided_slice %59 {offsets = [0, 32], sizes = [2, 32], strides = [1, 1]} : vector<2x96xf32> to vector<2x32xf32>
    %63 = arith.mulf %62, %47 : vector<2x32xf32>
    %64 = vector.extract_strided_slice %59 {offsets = [0, 0], sizes = [2, 32], strides = [1, 1]} : vector<2x96xf32> to vector<2x32xf32>
    %65 = arith.mulf %64, %61 : vector<2x32xf32>
    %66 = arith.addf %63, %65 : vector<2x32xf32>
    %67 = vector.extract_strided_slice %59 {offsets = [0, 64], sizes = [2, 32], strides = [1, 1]} : vector<2x96xf32> to vector<2x32xf32>
    %68 = math.tanh %66 : vector<2x32xf32>
    %69 = arith.mulf %67, %68 : vector<2x32xf32>
    %cst_16 = arith.constant dense<0.000000e+00> : vector<2x128xf32>
    %70 = tpu.matmul %69, %1, %cst_16 {dimension_numbers = #tpu.dot_dimension_numbers<[1], [0], [0], [1], [0, 0, 1, 1], [], []>} : vector<2x32xf32>, vector<32x128xf32>, vector<2x128xf32> -> vector<2x128xf32>
    %71 = vector.extract_strided_slice %10 {offsets = [6, 0], sizes = [2, 128], strides = [1, 1]} : vector<16x128xf32> to vector<2x128xf32>
    %72 = arith.addf %70, %71 : vector<2x128xf32>
    %73 = vector.extract_strided_slice %72 {offsets = [0, 0], sizes = [2, 96], strides = [1, 1]} : vector<2x128xf32> to vector<2x96xf32>
    %74 = arith.negf %73 : vector<2x96xf32>
    %75 = math.exp %74 : vector<2x96xf32>
    %cst_17 = arith.constant 1.000000e+00 : f32
    %76 = vector.broadcast %cst_17 : f32 to vector<2x96xf32>
    %77 = arith.addf %76, %75 : vector<2x96xf32>
    %78 = arith.divf %76, %77 : vector<2x96xf32>
    %79 = vector.extract_strided_slice %72 {offsets = [0, 96], sizes = [2, 32], strides = [1, 1]} : vector<2x128xf32> to vector<2x32xf32>
    %80 = math.tanh %79 : vector<2x32xf32>
    %81 = vector.extract_strided_slice %78 {offsets = [0, 32], sizes = [2, 32], strides = [1, 1]} : vector<2x96xf32> to vector<2x32xf32>
    %82 = arith.mulf %81, %66 : vector<2x32xf32>
    %83 = vector.extract_strided_slice %78 {offsets = [0, 0], sizes = [2, 32], strides = [1, 1]} : vector<2x96xf32> to vector<2x32xf32>
    %84 = arith.mulf %83, %80 : vector<2x32xf32>
    %85 = arith.addf %82, %84 : vector<2x32xf32>
    %86 = vector.extract_strided_slice %78 {offsets = [0, 64], sizes = [2, 32], strides = [1, 1]} : vector<2x96xf32> to vector<2x32xf32>
    %87 = math.tanh %85 : vector<2x32xf32>
    %88 = arith.mulf %86, %87 : vector<2x32xf32>
    %cst_18 = arith.constant dense<0.000000e+00> : vector<2x128xf32>
    %89 = tpu.matmul %88, %1, %cst_18 {dimension_numbers = #tpu.dot_dimension_numbers<[1], [0], [0], [1], [0, 0, 1, 1], [], []>} : vector<2x32xf32>, vector<32x128xf32>, vector<2x128xf32> -> vector<2x128xf32>
    %90 = vector.extract_strided_slice %10 {offsets = [8, 0], sizes = [2, 128], strides = [1, 1]} : vector<16x128xf32> to vector<2x128xf32>
    %91 = arith.addf %89, %90 : vector<2x128xf32>
    %92 = vector.extract_strided_slice %91 {offsets = [0, 0], sizes = [2, 96], strides = [1, 1]} : vector<2x128xf32> to vector<2x96xf32>
    %93 = arith.negf %92 : vector<2x96xf32>
    %94 = math.exp %93 : vector<2x96xf32>
    %cst_19 = arith.constant 1.000000e+00 : f32
    %95 = vector.broadcast %cst_19 : f32 to vector<2x96xf32>
    %96 = arith.addf %95, %94 : vector<2x96xf32>
    %97 = arith.divf %95, %96 : vector<2x96xf32>
    %98 = vector.extract_strided_slice %91 {offsets = [0, 96], sizes = [2, 32], strides = [1, 1]} : vector<2x128xf32> to vector<2x32xf32>
    %99 = math.tanh %98 : vector<2x32xf32>
    %100 = vector.extract_strided_slice %97 {offsets = [0, 32], sizes = [2, 32], strides = [1, 1]} : vector<2x96xf32> to vector<2x32xf32>
    %101 = arith.mulf %100, %85 : vector<2x32xf32>
    %102 = vector.extract_strided_slice %97 {offsets = [0, 0], sizes = [2, 32], strides = [1, 1]} : vector<2x96xf32> to vector<2x32xf32>
    %103 = arith.mulf %102, %99 : vector<2x32xf32>
    %104 = arith.addf %101, %103 : vector<2x32xf32>
    %105 = vector.extract_strided_slice %97 {offsets = [0, 64], sizes = [2, 32], strides = [1, 1]} : vector<2x96xf32> to vector<2x32xf32>
    %106 = math.tanh %104 : vector<2x32xf32>
    %107 = arith.mulf %105, %106 : vector<2x32xf32>
    %cst_20 = arith.constant dense<0.000000e+00> : vector<2x128xf32>
    %108 = tpu.matmul %107, %1, %cst_20 {dimension_numbers = #tpu.dot_dimension_numbers<[1], [0], [0], [1], [0, 0, 1, 1], [], []>} : vector<2x32xf32>, vector<32x128xf32>, vector<2x128xf32> -> vector<2x128xf32>
    %109 = vector.extract_strided_slice %10 {offsets = [10, 0], sizes = [2, 128], strides = [1, 1]} : vector<16x128xf32> to vector<2x128xf32>
    %110 = arith.addf %108, %109 : vector<2x128xf32>
    %111 = vector.extract_strided_slice %110 {offsets = [0, 0], sizes = [2, 96], strides = [1, 1]} : vector<2x128xf32> to vector<2x96xf32>
    %112 = arith.negf %111 : vector<2x96xf32>
    %113 = math.exp %112 : vector<2x96xf32>
    %cst_21 = arith.constant 1.000000e+00 : f32
    %114 = vector.broadcast %cst_21 : f32 to vector<2x96xf32>
    %115 = arith.addf %114, %113 : vector<2x96xf32>
    %116 = arith.divf %114, %115 : vector<2x96xf32>
    %117 = vector.extract_strided_slice %110 {offsets = [0, 96], sizes = [2, 32], strides = [1, 1]} : vector<2x128xf32> to vector<2x32xf32>
    %118 = math.tanh %117 : vector<2x32xf32>
    %119 = vector.extract_strided_slice %116 {offsets = [0, 32], sizes = [2, 32], strides = [1, 1]} : vector<2x96xf32> to vector<2x32xf32>
    %120 = arith.mulf %119, %104 : vector<2x32xf32>
    %121 = vector.extract_strided_slice %116 {offsets = [0, 0], sizes = [2, 32], strides = [1, 1]} : vector<2x96xf32> to vector<2x32xf32>
    %122 = arith.mulf %121, %118 : vector<2x32xf32>
    %123 = arith.addf %120, %122 : vector<2x32xf32>
    %124 = vector.extract_strided_slice %116 {offsets = [0, 64], sizes = [2, 32], strides = [1, 1]} : vector<2x96xf32> to vector<2x32xf32>
    %125 = math.tanh %123 : vector<2x32xf32>
    %126 = arith.mulf %124, %125 : vector<2x32xf32>
    %cst_22 = arith.constant dense<0.000000e+00> : vector<2x128xf32>
    %127 = tpu.matmul %126, %1, %cst_22 {dimension_numbers = #tpu.dot_dimension_numbers<[1], [0], [0], [1], [0, 0, 1, 1], [], []>} : vector<2x32xf32>, vector<32x128xf32>, vector<2x128xf32> -> vector<2x128xf32>
    %128 = vector.extract_strided_slice %10 {offsets = [12, 0], sizes = [2, 128], strides = [1, 1]} : vector<16x128xf32> to vector<2x128xf32>
    %129 = arith.addf %127, %128 : vector<2x128xf32>
    %130 = vector.extract_strided_slice %129 {offsets = [0, 0], sizes = [2, 96], strides = [1, 1]} : vector<2x128xf32> to vector<2x96xf32>
    %131 = arith.negf %130 : vector<2x96xf32>
    %132 = math.exp %131 : vector<2x96xf32>
    %cst_23 = arith.constant 1.000000e+00 : f32
    %133 = vector.broadcast %cst_23 : f32 to vector<2x96xf32>
    %134 = arith.addf %133, %132 : vector<2x96xf32>
    %135 = arith.divf %133, %134 : vector<2x96xf32>
    %136 = vector.extract_strided_slice %129 {offsets = [0, 96], sizes = [2, 32], strides = [1, 1]} : vector<2x128xf32> to vector<2x32xf32>
    %137 = math.tanh %136 : vector<2x32xf32>
    %138 = vector.extract_strided_slice %135 {offsets = [0, 32], sizes = [2, 32], strides = [1, 1]} : vector<2x96xf32> to vector<2x32xf32>
    %139 = arith.mulf %138, %123 : vector<2x32xf32>
    %140 = vector.extract_strided_slice %135 {offsets = [0, 0], sizes = [2, 32], strides = [1, 1]} : vector<2x96xf32> to vector<2x32xf32>
    %141 = arith.mulf %140, %137 : vector<2x32xf32>
    %142 = arith.addf %139, %141 : vector<2x32xf32>
    %143 = vector.extract_strided_slice %135 {offsets = [0, 64], sizes = [2, 32], strides = [1, 1]} : vector<2x96xf32> to vector<2x32xf32>
    %144 = math.tanh %142 : vector<2x32xf32>
    %145 = arith.mulf %143, %144 : vector<2x32xf32>
    %cst_24 = arith.constant dense<0.000000e+00> : vector<2x128xf32>
    %146 = tpu.matmul %145, %1, %cst_24 {dimension_numbers = #tpu.dot_dimension_numbers<[1], [0], [0], [1], [0, 0, 1, 1], [], []>} : vector<2x32xf32>, vector<32x128xf32>, vector<2x128xf32> -> vector<2x128xf32>
    %147 = vector.extract_strided_slice %10 {offsets = [14, 0], sizes = [2, 128], strides = [1, 1]} : vector<16x128xf32> to vector<2x128xf32>
    %148 = arith.addf %146, %147 : vector<2x128xf32>
    %149 = vector.extract_strided_slice %148 {offsets = [0, 0], sizes = [2, 96], strides = [1, 1]} : vector<2x128xf32> to vector<2x96xf32>
    %150 = arith.negf %149 : vector<2x96xf32>
    %151 = math.exp %150 : vector<2x96xf32>
    %cst_25 = arith.constant 1.000000e+00 : f32
    %152 = vector.broadcast %cst_25 : f32 to vector<2x96xf32>
    %153 = arith.addf %152, %151 : vector<2x96xf32>
    %154 = arith.divf %152, %153 : vector<2x96xf32>
    %155 = vector.extract_strided_slice %148 {offsets = [0, 96], sizes = [2, 32], strides = [1, 1]} : vector<2x128xf32> to vector<2x32xf32>
    %156 = math.tanh %155 : vector<2x32xf32>
    %157 = vector.extract_strided_slice %154 {offsets = [0, 32], sizes = [2, 32], strides = [1, 1]} : vector<2x96xf32> to vector<2x32xf32>
    %158 = arith.mulf %157, %142 : vector<2x32xf32>
    %159 = vector.extract_strided_slice %154 {offsets = [0, 0], sizes = [2, 32], strides = [1, 1]} : vector<2x96xf32> to vector<2x32xf32>
    %160 = arith.mulf %159, %156 : vector<2x32xf32>
    %161 = arith.addf %158, %160 : vector<2x32xf32>
    %162 = vector.extract_strided_slice %154 {offsets = [0, 64], sizes = [2, 32], strides = [1, 1]} : vector<2x96xf32> to vector<2x32xf32>
    %163 = math.tanh %161 : vector<2x32xf32>
    %164 = arith.mulf %162, %163 : vector<2x32xf32>
    %165 = vector.extract_strided_slice %164 {offsets = [0, 0], sizes = [1, 32], strides = [1, 1]} : vector<2x32xf32> to vector<1x32xf32>
    %166 = vector.extract_strided_slice %2 {offsets = [0, 0], sizes = [32, 128], strides = [1, 1]} : vector<64x128xf32> to vector<32x128xf32>
    %cst_26 = arith.constant dense<0.000000e+00> : vector<1x128xf32>
    %167 = tpu.matmul %165, %166, %cst_26 {dimension_numbers = #tpu.dot_dimension_numbers<[1], [0], [0], [1], [0, 0, 1, 1], [], []>} : vector<1x32xf32>, vector<32x128xf32>, vector<1x128xf32> -> vector<1x128xf32>
    %168 = vector.extract_strided_slice %164 {offsets = [1, 0], sizes = [1, 32], strides = [1, 1]} : vector<2x32xf32> to vector<1x32xf32>
    %169 = vector.extract_strided_slice %2 {offsets = [32, 0], sizes = [32, 128], strides = [1, 1]} : vector<64x128xf32> to vector<32x128xf32>
    %cst_27 = arith.constant dense<0.000000e+00> : vector<1x128xf32>
    %170 = tpu.matmul %168, %169, %cst_27 {dimension_numbers = #tpu.dot_dimension_numbers<[1], [0], [0], [1], [0, 0, 1, 1], [], []>} : vector<1x32xf32>, vector<32x128xf32>, vector<1x128xf32> -> vector<1x128xf32>
    %171 = arith.addf %167, %170 : vector<1x128xf32>
    %172 = arith.addf %171, %3 : vector<1x128xf32>
    %c0_28 = arith.constant 0 : index
    %c0_29 = arith.constant 0 : index
    %173 = vector.load %arg4[%c0_28, %c0_29] : memref<1x128xf32, #tpu.memory_space<vmem>>, vector<1x128xf32>
    tpu.vector_store %arg4[%c0_28, %c0_29], %172 {strides = array<i32>} : memref<1x128xf32, #tpu.memory_space<vmem>>, vector<1x128xf32>,
    return
  }
}

</mosaic_0001>

<llo_original>
// kernel: siamese_forward.1
$region0: #{siamese_forward.1}
  #allocation0 [shape = 'u32[]', space=smem, size = 0x4, offset = 0x4, fixed_abs, tag = 'smem constant byte address 0x4 - core index']
  #allocation1 [shape = 'u32[144,128]{1,0:T(1,128)}', space=vmem, size = 0x12000, scoped, tag = 'internal scratch']
  %s0 = inlined_call_operand.vmem [shape: s32[16,1], index: 0, kind: input, shape index: {}]
  %s1 = inlined_call_operand.hbm [shape: f32[168,128], index: 1, kind: input, shape index: {}]
  %s2 = inlined_call_operand.vmem [shape: f32[2,32], index: 2, kind: input, shape index: {}]
  %s3 = inlined_call_operand.vmem [shape: f32[2,32], index: 3, kind: input, shape index: {}]
  %s4 = inlined_call_operand.vmem [shape: f32[1,128], index: 4, kind: output, shape index: {}]
  %s5 = sld [smem:[#allocation0]]
  $region30: #{siamese_forward.1} parent=0
    _
  %s7 = ssub.s32 1, %s5
  %s8 = scalar_select 0, %s7, %s5
  $region1: #{siamese_forward.1} parent=0
    #allocation2 [shape = 'u8[86016]{0}', space=vmem, size = 0x15000, scoped, tag = 'input window, operand 1, single buffered']
    #allocation3 [shape = 's32[1]{0}', space=sflag, size = 0x4, scoped, tag = 'scoped memory for siamese_forward.1']
    %9 = vsyncpa [#allocation3], 0
    // Predicated region
    $region2: #{siamese_forward.1} parent=1 // pred_check
      _
    $region3: #{siamese_forward.1} parent=1 // pred_check_branch
      %11 = sbr.rel (0) target = $region5
    $region4: #{siamese_forward.1} parent=1 // pred_region
      _
    $region5: #{siamese_forward.1} parent=1 // pred_fallthru
      _
    // Predicated region
    $region6: #{siamese_forward.1} parent=1 // pred_check
      _
    $region7: #{siamese_forward.1} parent=1 // pred_check_branch
      %13 = sbr.rel (0) target = $region9
    $region8: #{siamese_forward.1} parent=1 // pred_region
      %s15 = ssub.s32 2688, 2688
      %16 = vsyncadd [#allocation3], %s15
      %s17 = sshll.u32 [#allocation2], 4
      %s18 = int_to_ptr.vmem [resolvable:$true] %s17
      %23 = dma.hbm_to_vmem [thread:$0]  %s1, 2688, %s18, [#allocation3], 128, 128, 8
    $region9: #{siamese_forward.1} parent=1 // pred_fallthru
      _
    // Predicated region
    $region10: #{siamese_forward.1} parent=1 // pred_check
      _
    $region11: #{siamese_forward.1} parent=1 // pred_check_branch
      %25 = sbr.rel (0) target = $region13
    $region12: #{siamese_forward.1} parent=1 // pred_region
      _
    $region13: #{siamese_forward.1} parent=1 // pred_fallthru
      _
    // Predicated region
    $region14: #{siamese_forward.1} parent=1 // pred_check
      _
    $region15: #{siamese_forward.1} parent=1 // pred_check_branch
      %27 = sbr.rel (0) target = $region17
    $region16: #{siamese_forward.1} parent=1 // pred_region
      _
    $region17: #{siamese_forward.1} parent=1 // pred_fallthru
      _
    // Predicated region
    $region18: #{siamese_forward.1} parent=1 // pred_check
      _
    $region19: #{siamese_forward.1} parent=1 // pred_check_branch
      %29 = sbr.rel (0) target = $region21
    $region20: #{siamese_forward.1} parent=1 // pred_region
      %30 = dma.done [#allocation3], 2688
    $region21: #{siamese_forward.1} parent=1 // pred_fallthru
      _
    %v31 = vld [vmem:[#allocation2] sm:$0xff]
    %v32 = vld [vmem:[#allocation2 + $0x8] sm:$0xff]
    %v33 = vld [vmem:[#allocation2 + $0x10] sm:$0xff]
    %v34 = vld [vmem:[#allocation2 + $0x18] sm:$0xff]
    %v35 = vld [vmem:[#allocation2 + $0x20] sm:$0xff]
    %v36 = vld [vmem:[#allocation2 + $0x28] sm:$0xff]
    %v37 = vld [vmem:[#allocation2 + $0x30] sm:$0xff]
    %v38 = vld [vmem:[#allocation2 + $0x38] sm:$0xff]
    %v39 = vld [vmem:[#allocation2 + $0x40] sm:$0xff]
    %v40 = vld [vmem:[#allocation2 + $0x48] sm:$0xff]
    %v41 = vld [vmem:[#allocation2 + $0x50] sm:$0xff]
    %v42 = vld [vmem:[#allocation2 + $0x58] sm:$0xff]
    %v43 = vld [vmem:[#allocation2 + $0x60] sm:$0xff]
    %v44 = vld [vmem:[#allocation2 + $0x68] sm:$0xff]
    %v45 = vld [vmem:[#allocation2 + $0x70] sm:$0xff]
    %v46 = vld [vmem:[#allocation2 + $0x78] sm:$0xff]
    %v47 = vld [vmem:[#allocation2 + $0x80] sm:$0xff]
    %v48 = vld [vmem:[#allocation2 + $0x88] sm:$0xff]
    %v49 = vld [vmem:[#allocation2 + $0x90] sm:$0xff]
    %v50 = vld [vmem:[#allocation2 + $0x98] sm:$0xff]
    %v51 = vld [vmem:[#allocation2 + $0xa0] sm:$0x1]
    %v52 = vlaneseq
    %v53 = vand.u32 %v52, 127
    %v54 = vld [vmem:[%s0] sm:$0xff]
    %v55 = vld [vmem:[%s0 + $0x8] sm:$0xff]
    %56 = vset.pattern.permute.xlu0 0
    %57 = vperm.xlu0 %56, %v54
    %v58 = vpop.permute.xlu0 %57
    %59 = vset.pattern.permute.xlu0 0
    %60 = vperm.xlu0 %59, %v55
    %v61 = vpop.permute.xlu0 %60
    %vm62 = vcmp.eq.s32.totalorder %v53, %v58
    %vm63 = vcmp.eq.s32.totalorder %v53, %v61
    %v64 = vsel %vm62, 1, 0
    %v65 = vsel %vm63, 1, 0
    %v66 = vcvt.s32.f32 %v64
    %v67 = vcvt.s32.f32 %v65
    %vm68 = vcmask 523264
    %v70 = vsel %vm68, %v66, 0
    %v73 = vsel %vm68, %v67, 0
    %75 = vmatprep.subr.mxu0 0.0
    %76 = vmatpush1.msra.mxu0 %v31
    %77 = vmatprep.subr.mxu0 0.0
    %78 = vmatpush1.msra.mxu0 %v32
    %79 = vmatprep.subr.mxu0 0.0
    %80 = vmatpush1.msra.mxu0 %v33
    %81 = vmatprep.subr.mxu0 0.0
    %82 = vmatpush1.msra.mxu0 %v34
    %83 = vmatprep.subr.mxu0 0.0
    %84 = vmatpush1.msra.mxu0 %v35
    %85 = vmatprep.subr.mxu0 0.0
    %86 = vmatpush1.msra.mxu0 %v36
    %87 = vmatprep.subr.mxu0 0.0
    %88 = vmatpush1.msra.mxu0 %v37
    %89 = vmatprep.subr.mxu0 0.0
    %90 = vmatpush1.msra.mxu0 %v38
    %91 = vmatprep.subr.mxu0 0.0
    %92 = vmatpush1.msra.mxu0 0.0
    %93 = vmatprep.subr.mxu0 0.0
    %94 = vmatpush1.msra.mxu0 0.0
    %95 = vmatprep.subr.mxu0 0.0
    %96 = vmatpush1.msra.mxu0 0.0
    %97 = vmatprep.subr.mxu0 0.0
    %98 = vmatpush1.msra.mxu0 0.0
    %99 = vmatprep.subr.mxu0 0.0
    %100 = vmatpush1.msra.mxu0 0.0
    %101 = vmatprep.subr.mxu0 0.0
    %102 = vmatpush1.msra.mxu0 0.0
    %103 = vmatprep.subr.mxu0 0.0
    %104 = vmatpush1.msra.mxu0 0.0
    %105 = vmatprep.subr.mxu0 0.0
    %106 = vmatpush1.msra.mxu0 0.0
    %107 = vmatprep.subr.mxu0 0.0
    %108 = vmatpush1.msra.mxu0 0.0
    %109 = vmatprep.subr.mxu0 0.0
    %110 = vmatpush1.msra.mxu0 0.0
    %111 = vmatprep.subr.mxu0 0.0
    %112 = vmatpush1.msra.mxu0 0.0
    %113 = vmatprep.subr.mxu0 0.0
    %114 = vmatpush1.msra.mxu0 0.0
    %115 = vmatprep.subr.mxu0 0.0
    %116 = vmatpush1.msra.mxu0 0.0
    %117 = vmatprep.subr.mxu0 0.0
    %118 = vmatpush1.msra.mxu0 0.0
    %119 = vmatprep.subr.mxu0 0.0
    %120 = vmatpush1.msra.mxu0 0.0
    %121 = vmatprep.subr.mxu0 0.0
    %122 = vmatpush1.msra.mxu0 0.0
    %123 = vmatprep.subr.mxu0 0.0
    %124 = vmatpush1.msra.mxu0 0.0
    %125 = vmatprep.subr.mxu0 0.0
    %126 = vmatpush1.msra.mxu0 0.0
    %127 = vmatprep.subr.mxu0 0.0
    %128 = vmatpush1.msra.mxu0 0.0
    %129 = vmatprep.subr.mxu0 0.0
    %130 = vmatpush1.msra.mxu0 0.0
    %131 = vmatprep.subr.mxu0 0.0
    %132 = vmatpush1.msra.mxu0 0.0
    %133 = vmatprep.subr.mxu0 0.0
    %134 = vmatpush1.msra.mxu0 0.0
    %135 = vmatprep.subr.mxu0 0.0
    %136 = vmatpush1.msra.mxu0 0.0
    %137 = vmatprep.subr.mxu0 0.0
    %138 = vmatpush1.msra.mxu0 0.0
    %139 = vmatprep.mubr.f32.mxu0 0.0
    %140 = vmatmul.mubr.f32.gmra.mrb[0].mxu0 %v70
    %v141 = vpop.f32.mrb[0].mxu0
    %v142 = vadd.f32 0.0, %v141
    %v143 = vpop.f32.mrb[0].mxu0
    %144 = vmatprep.mubr.f32.mxu0 0.0
    %145 = vmatmul.mubr.f32.gmra.mrb[0].mxu0 %v73
    %v146 = vpop.f32.mrb[0].mxu0
    %v147 = vadd.f32 0.0, %v146
    %v148 = vpop.f32.mrb[0].mxu0
    %149 = vdwg.mxu0
    %v150 = vld [vmem:[%s2] sm:$0x3]
    %v151 = vld [vmem:[%s3] sm:$0x3]
    %vm152 = vcmask 261120
    %v154 = vsel %vm152, %v150, 0
    %156 = vmatprep.subr.mxu0 0.0
    %157 = vmatpush1.msra.mxu0 %v39
    %158 = vmatprep.subr.mxu0 0.0
    %159 = vmatpush1.msra.mxu0 %v40
    %160 = vmatprep.subr.mxu0 0.0
    %161 = vmatpush1.msra.mxu0 %v41
    %162 = vmatprep.subr.mxu0 0.0
    %163 = vmatpush1.msra.mxu0 %v42
    %164 = vmatprep.subr.mxu0 0.0
    %165 = vmatpush1.msra.mxu0 0.0
    %166 = vmatprep.subr.mxu0 0.0
    %167 = vmatpush1.msra.mxu0 0.0
    %168 = vmatprep.subr.mxu0 0.0
    %169 = vmatpush1.msra.mxu0 0.0
    %170 = vmatprep.subr.mxu0 0.0
    %171 = vmatpush1.msra.mxu0 0.0
    %172 = vmatprep.subr.mxu0 0.0
    %173 = vmatpush1.msra.mxu0 0.0
    %174 = vmatprep.subr.mxu0 0.0
    %175 = vmatpush1.msra.mxu0 0.0
    %176 = vmatprep.subr.mxu0 0.0
    %177 = vmatpush1.msra.mxu0 0.0
    %178 = vmatprep.subr.mxu0 0.0
    %179 = vmatpush1.msra.mxu0 0.0
    %180 = vmatprep.subr.mxu0 0.0
    %181 = vmatpush1.msra.mxu0 0.0
    %182 = vmatprep.subr.mxu0 0.0
    %183 = vmatpush1.msra.mxu0 0.0
    %184 = vmatprep.subr.mxu0 0.0
    %185 = vmatpush1.msra.mxu0 0.0
    %186 = vmatprep.subr.mxu0 0.0
    %187 = vmatpush1.msra.mxu0 0.0
    %188 = vmatprep.subr.mxu0 0.0
    %189 = vmatpush1.msra.mxu0 0.0
    %190 = vmatprep.subr.mxu0 0.0
    %191 = vmatpush1.msra.mxu0 0.0
    %192 = vmatprep.subr.mxu0 0.0
    %193 = vmatpush1.msra.mxu0 0.0
    %194 = vmatprep.subr.mxu0 0.0
    %195 = vmatpush1.msra.mxu0 0.0
    %196 = vmatprep.subr.mxu0 0.0
    %197 = vmatpush1.msra.mxu0 0.0
    %198 = vmatprep.subr.mxu0 0.0
    %199 = vmatpush1.msra.mxu0 0.0
    %200 = vmatprep.subr.mxu0 0.0
    %201 = vmatpush1.msra.mxu0 0.0
    %202 = vmatprep.subr.mxu0 0.0
    %203 = vmatpush1.msra.mxu0 0.0
    %204 = vmatprep.subr.mxu0 0.0
    %205 = vmatpush1.msra.mxu0 0.0
    %206 = vmatprep.subr.mxu0 0.0
    %207 = vmatpush1.msra.mxu0 0.0
    %208 = vmatprep.subr.mxu0 0.0
    %209 = vmatpush1.msra.mxu0 0.0
    %210 = vmatprep.subr.mxu0 0.0
    %211 = vmatpush1.msra.mxu0 0.0
    %212 = vmatprep.subr.mxu0 0.0
    %213 = vmatpush1.msra.mxu0 0.0
    %214 = vmatprep.subr.mxu0 0.0
    %215 = vmatpush1.msra.mxu0 0.0
    %216 = vmatprep.subr.mxu0 0.0
    %217 = vmatpush1.msra.mxu0 0.0
    %218 = vmatprep.subr.mxu0 0.0
    %219 = vmatpush1.msra.mxu0 0.0
    %220 = vmatprep.mubr.f32.mxu0 0.0
    %221 = vmatmul.mubr.f32.gmra.mrb[0].mxu0 %v154
    %v222 = vpop.f32.mrb[0].mxu0
    %v223 = vadd.f32 %v142, %v222
    %v224 = vpop.f32.mrb[0].mxu0
    %225 = vdwg.mxu0
    %v226 = vxor.u32 %v223, 2147483648
    %v227 = vmul.f32 %v226, 1.442695
    %v228 = vpow.pop %v227
    %v229 = vadd.f32 %v228, 1.0
    %v230 = vrcp.pop %v229
    %v231 = vmul.f32 1.0, %v230
    %v232 = vtanh.pop %v223
    %234 = vrot.lane.b32.xlu0 %v151, 32
    %v235 = vpop.permute.xlu0 %234
    %v237 = vmul.f32 %v231, %v235
    %239 = vrot.lane.b32.xlu0 %v232, 32
    %v240 = vpop.permute.xlu0 %239
    %v242 = vmul.f32 %v231, %v240
    %244 = vrot.lane.b32.xlu0 %v242, 32
    %v245 = vpop.permute.xlu0 %244
    %v247 = vadd.f32 %v237, %v245
    %v248 = vtanh.pop %v247
    %250 = vrot.lane.b32.xlu0 %v248, 32
    %v251 = vpop.permute.xlu0 %250
    %v253 = vmul.f32 %v231, %v251
    %255 = vrot.lane.b32.xlu0 %v253, 64
    %v256 = vpop.permute.xlu0 %255
    %v258 = vrot.slane %v142, 2
    %v260 = vsel %vm152, %v256, 0
    %262 = vmatprep.subr.mxu0 0.0
    %263 = vmatpush1.msra.mxu0 %v39
    %264 = vmatprep.subr.mxu0 0.0
    %265 = vmatpush1.msra.mxu0 %v40
    %266 = vmatprep.subr.mxu0 0.0
    %267 = vmatpush1.msra.mxu0 %v41
    %268 = vmatprep.subr.mxu0 0.0
    %269 = vmatpush1.msra.mxu0 %v42
    %270 = vmatprep.subr.mxu0 0.0
    %271 = vmatpush1.msra.mxu0 0.0
    %272 = vmatprep.subr.mxu0 0.0
    %273 = vmatpush1.msra.mxu0 0.0
    %274 = vmatprep.subr.mxu0 0.0
    %275 = vmatpush1.msra.mxu0 0.0
    %276 = vmatprep.subr.mxu0 0.0
    %277 = vmatpush1.msra.mxu0 0.0
    %278 = vmatprep.subr.mxu0 0.0
    %279 = vmatpush1.msra.mxu0 0.0
    %280 = vmatprep.subr.mxu0 0.0
    %281 = vmatpush1.msra.mxu0 0.0
    %282 = vmatprep.subr.mxu0 0.0
    %283 = vmatpush1.msra.mxu0 0.0
    %284 = vmatprep.subr.mxu0 0.0
    %285 = vmatpush1.msra.mxu0 0.0
    %286 = vmatprep.subr.mxu0 0.0
    %287 = vmatpush1.msra.mxu0 0.0
    %288 = vmatprep.subr.mxu0 0.0
    %289 = vmatpush1.msra.mxu0 0.0
    %290 = vmatprep.subr.mxu0 0.0
    %291 = vmatpush1.msra.mxu0 0.0
    %292 = vmatprep.subr.mxu0 0.0
    %293 = vmatpush1.msra.mxu0 0.0
    %294 = vmatprep.subr.mxu0 0.0
    %295 = vmatpush1.msra.mxu0 0.0
    %296 = vmatprep.subr.mxu0 0.0
    %297 = vmatpush1.msra.mxu0 0.0
    %298 = vmatprep.subr.mxu0 0.0
    %299 = vmatpush1.msra.mxu0 0.0
    %300 = vmatprep.subr.mxu0 0.0
    %301 = vmatpush1.msra.mxu0 0.0
    %302 = vmatprep.subr.mxu0 0.0
    %303 = vmatpush1.msra.mxu0 0.0
    %304 = vmatprep.subr.mxu0 0.0
    %305 = vmatpush1.msra.mxu0 0.0
    %306 = vmatprep.subr.mxu0 0.0
    %307 = vmatpush1.msra.mxu0 0.0
    %308 = vmatprep.subr.mxu0 0.0
    %309 = vmatpush1.msra.mxu0 0.0
    %310 = vmatprep.subr.mxu0 0.0
    %311 = vmatpush1.msra.mxu0 0.0
    %312 = vmatprep.subr.mxu0 0.0
    %313 = vmatpush1.msra.mxu0 0.0
    %314 = vmatprep.subr.mxu0 0.0
    %315 = vmatpush1.msra.mxu0 0.0
    %316 = vmatprep.subr.mxu0 0.0
    %317 = vmatpush1.msra.mxu0 0.0
    %318 = vmatprep.subr.mxu0 0.0
    %319 = vmatpush1.msra.mxu0 0.0
    %320 = vmatprep.subr.mxu0 0.0
    %321 = vmatpush1.msra.mxu0 0.0
    %322 = vmatprep.subr.mxu0 0.0
    %323 = vmatpush1.msra.mxu0 0.0
    %324 = vmatprep.subr.mxu0 0.0
    %325 = vmatpush1.msra.mxu0 0.0
    %326 = vmatprep.mubr.f32.mxu0 0.0
    %327 = vmatmul.mubr.f32.gmra.mrb[0].mxu0 %v260
    %v328 = vpop.f32.mrb[0].mxu0
    %v329 = vadd.f32 %v258, %v328
    %v330 = vpop.f32.mrb[0].mxu0
    %331 = vdwg.mxu0
    %v332 = vxor.u32 %v329, 2147483648
    %v333 = vmul.f32 %v332, 1.442695
    %v334 = vpow.pop %v333
    %v335 = vadd.f32 %v334, 1.0
    %v336 = vrcp.pop %v335
    %v337 = vmul.f32 1.0, %v336
    %v338 = vtanh.pop %v329
    %v339 = vmul.f32 %v337, %v247
    %341 = vrot.lane.b32.xlu0 %v338, 32
    %v342 = vpop.permute.xlu0 %341
    %v344 = vmul.f32 %v337, %v342
    %346 = vrot.lane.b32.xlu0 %v344, 32
    %v347 = vpop.permute.xlu0 %346
    %v349 = vadd.f32 %v339, %v347
    %v350 = vtanh.pop %v349
    %352 = vrot.lane.b32.xlu0 %v350, 32
    %v353 = vpop.permute.xlu0 %352
    %v355 = vmul.f32 %v337, %v353
    %357 = vrot.lane.b32.xlu0 %v355, 64
    %v358 = vpop.permute.xlu0 %357
    %v359 = vrot.slane %v142, 4
    %v361 = vsel %vm152, %v358, 0
    %363 = vmatprep.subr.mxu0 0.0
    %364 = vmatpush1.msra.mxu0 %v39
    %365 = vmatprep.subr.mxu0 0.0
    %366 = vmatpush1.msra.mxu0 %v40
    %367 = vmatprep.subr.mxu0 0.0
    %368 = vmatpush1.msra.mxu0 %v41
    %369 = vmatprep.subr.mxu0 0.0
    %370 = vmatpush1.msra.mxu0 %v42
    %371 = vmatprep.subr.mxu0 0.0
    %372 = vmatpush1.msra.mxu0 0.0
    %373 = vmatprep.subr.mxu0 0.0
    %374 = vmatpush1.msra.mxu0 0.0
    %375 = vmatprep.subr.mxu0 0.0
    %376 = vmatpush1.msra.mxu0 0.0
    %377 = vmatprep.subr.mxu0 0.0
    %378 = vmatpush1.msra.mxu0 0.0
    %379 = vmatprep.subr.mxu0 0.0
    %380 = vmatpush1.msra.mxu0 0.0
    %381 = vmatprep.subr.mxu0 0.0
    %382 = vmatpush1.msra.mxu0 0.0
    %383 = vmatprep.subr.mxu0 0.0
    %384 = vmatpush1.msra.mxu0 0.0
    %385 = vmatprep.subr.mxu0 0.0
    %386 = vmatpush1.msra.mxu0 0.0
    %387 = vmatprep.subr.mxu0 0.0
    %388 = vmatpush1.msra.mxu0 0.0
    %389 = vmatprep.subr.mxu0 0.0
    %390 = vmatpush1.msra.mxu0 0.0
    %391 = vmatprep.subr.mxu0 0.0
    %392 = vmatpush1.msra.mxu0 0.0
    %393 = vmatprep.subr.mxu0 0.0
    %394 = vmatpush1.msra.mxu0 0.0
    %395 = vmatprep.subr.mxu0 0.0
    %396 = vmatpush1.msra.mxu0 0.0
    %397 = vmatprep.subr.mxu0 0.0
    %398 = vmatpush1.msra.mxu0 0.0
    %399 = vmatprep.subr.mxu0 0.0
    %400 = vmatpush1.msra.mxu0 0.0
    %401 = vmatprep.subr.mxu0 0.0
    %402 = vmatpush1.msra.mxu0 0.0
    %403 = vmatprep.subr.mxu0 0.0
    %404 = vmatpush1.msra.mxu0 0.0
    %405 = vmatprep.subr.mxu0 0.0
    %406 = vmatpush1.msra.mxu0 0.0
    %407 = vmatprep.subr.mxu0 0.0
    %408 = vmatpush1.msra.mxu0 0.0
    %409 = vmatprep.subr.mxu0 0.0
    %410 = vmatpush1.msra.mxu0 0.0
    %411 = vmatprep.subr.mxu0 0.0
    %412 = vmatpush1.msra.mxu0 0.0
    %413 = vmatprep.subr.mxu0 0.0
    %414 = vmatpush1.msra.mxu0 0.0
    %415 = vmatprep.subr.mxu0 0.0
    %416 = vmatpush1.msra.mxu0 0.0
    %417 = vmatprep.subr.mxu0 0.0
    %418 = vmatpush1.msra.mxu0 0.0
    %419 = vmatprep.subr.mxu0 0.0
    %420 = vmatpush1.msra.mxu0 0.0
    %421 = vmatprep.subr.mxu0 0.0
    %422 = vmatpush1.msra.mxu0 0.0
    %423 = vmatprep.subr.mxu0 0.0
    %424 = vmatpush1.msra.mxu0 0.0
    %425 = vmatprep.subr.mxu0 0.0
    %426 = vmatpush1.msra.mxu0 0.0
    %427 = vmatprep.mubr.f32.mxu0 0.0
    %428 = vmatmul.mubr.f32.gmra.mrb[0].mxu0 %v361
    %v429 = vpop.f32.mrb[0].mxu0
    %v430 = vadd.f32 %v359, %v429
    %v431 = vpop.f32.mrb[0].mxu0
    %432 = vdwg.mxu0
    %v433 = vxor.u32 %v430, 2147483648
    %v434 = vmul.f32 %v433, 1.442695
    %v435 = vpow.pop %v434
    %v436 = vadd.f32 %v435, 1.0
    %v437 = vrcp.pop %v436
    %v438 = vmul.f32 1.0, %v437
    %v439 = vtanh.pop %v430
    %v440 = vmul.f32 %v438, %v349
    %442 = vrot.lane.b32.xlu0 %v439, 32
    %v443 = vpop.permute.xlu0 %442
    %v445 = vmul.f32 %v438, %v443
    %447 = vrot.lane.b32.xlu0 %v445, 32
    %v448 = vpop.permute.xlu0 %447
    %v450 = vadd.f32 %v440, %v448
    %v451 = vtanh.pop %v450
    %453 = vrot.lane.b32.xlu0 %v451, 32
    %v454 = vpop.permute.xlu0 %453
    %v456 = vmul.f32 %v438, %v454
    %458 = vrot.lane.b32.xlu0 %v456, 64
    %v459 = vpop.permute.xlu0 %458
    %v460 = vrot.slane %v142, 6
    %v462 = vsel %vm152, %v459, 0
    %464 = vmatprep.subr.mxu0 0.0
    %465 = vmatpush1.msra.mxu0 %v39
    %466 = vmatprep.subr.mxu0 0.0
    %467 = vmatpush1.msra.mxu0 %v40
    %468 = vmatprep.subr.mxu0 0.0
    %469 = vmatpush1.msra.mxu0 %v41
    %470 = vmatprep.subr.mxu0 0.0
    %471 = vmatpush1.msra.mxu0 %v42
    %472 = vmatprep.subr.mxu0 0.0
    %473 = vmatpush1.msra.mxu0 0.0
    %474 = vmatprep.subr.mxu0 0.0
    %475 = vmatpush1.msra.mxu0 0.0
    %476 = vmatprep.subr.mxu0 0.0
    %477 = vmatpush1.msra.mxu0 0.0
    %478 = vmatprep.subr.mxu0 0.0
    %479 = vmatpush1.msra.mxu0 0.0
    %480 = vmatprep.subr.mxu0 0.0
    %481 = vmatpush1.msra.mxu0 0.0
    %482 = vmatprep.subr.mxu0 0.0
    %483 = vmatpush1.msra.mxu0 0.0
    %484 = vmatprep.subr.mxu0 0.0
    %485 = vmatpush1.msra.mxu0 0.0
    %486 = vmatprep.subr.mxu0 0.0
    %487 = vmatpush1.msra.mxu0 0.0
    %488 = vmatprep.subr.mxu0 0.0
    %489 = vmatpush1.msra.mxu0 0.0
    %490 = vmatprep.subr.mxu0 0.0
    %491 = vmatpush1.msra.mxu0 0.0
    %492 = vmatprep.subr.mxu0 0.0
    %493 = vmatpush1.msra.mxu0 0.0
    %494 = vmatprep.subr.mxu0 0.0
    %495 = vmatpush1.msra.mxu0 0.0
    %496 = vmatprep.subr.mxu0 0.0
    %497 = vmatpush1.msra.mxu0 0.0
    %498 = vmatprep.subr.mxu0 0.0
    %499 = vmatpush1.msra.mxu0 0.0
    %500 = vmatprep.subr.mxu0 0.0
    %501 = vmatpush1.msra.mxu0 0.0
    %502 = vmatprep.subr.mxu0 0.0
    %503 = vmatpush1.msra.mxu0 0.0
    %504 = vmatprep.subr.mxu0 0.0
    %505 = vmatpush1.msra.mxu0 0.0
    %506 = vmatprep.subr.mxu0 0.0
    %507 = vmatpush1.msra.mxu0 0.0
    %508 = vmatprep.subr.mxu0 0.0
    %509 = vmatpush1.msra.mxu0 0.0
    %510 = vmatprep.subr.mxu0 0.0
    %511 = vmatpush1.msra.mxu0 0.0
    %512 = vmatprep.subr.mxu0 0.0
    %513 = vmatpush1.msra.mxu0 0.0
    %514 = vmatprep.subr.mxu0 0.0
    %515 = vmatpush1.msra.mxu0 0.0
    %516 = vmatprep.subr.mxu0 0.0
    %517 = vmatpush1.msra.mxu0 0.0
    %518 = vmatprep.subr.mxu0 0.0
    %519 = vmatpush1.msra.mxu0 0.0
    %520 = vmatprep.subr.mxu0 0.0
    %521 = vmatpush1.msra.mxu0 0.0
    %522 = vmatprep.subr.mxu0 0.0
    %523 = vmatpush1.msra.mxu0 0.0
    %524 = vmatprep.subr.mxu0 0.0
    %525 = vmatpush1.msra.mxu0 0.0
    %526 = vmatprep.subr.mxu0 0.0
    %527 = vmatpush1.msra.mxu0 0.0
    %528 = vmatprep.mubr.f32.mxu0 0.0
    %529 = vmatmul.mubr.f32.gmra.mrb[0].mxu0 %v462
    %v530 = vpop.f32.mrb[0].mxu0
    %v531 = vadd.f32 %v460, %v530
    %v532 = vpop.f32.mrb[0].mxu0
    %533 = vdwg.mxu0
    %v534 = vxor.u32 %v531, 2147483648
    %v535 = vmul.f32 %v534, 1.442695
    %v536 = vpow.pop %v535
    %v537 = vadd.f32 %v536, 1.0
    %v538 = vrcp.pop %v537
    %v539 = vmul.f32 1.0, %v538
    %v540 = vtanh.pop %v531
    %v541 = vmul.f32 %v539, %v450
    %543 = vrot.lane.b32.xlu0 %v540, 32
    %v544 = vpop.permute.xlu0 %543
    %v546 = vmul.f32 %v539, %v544
    %548 = vrot.lane.b32.xlu0 %v546, 32
    %v549 = vpop.permute.xlu0 %548
    %v551 = vadd.f32 %v541, %v549
    %v552 = vtanh.pop %v551
    %554 = vrot.lane.b32.xlu0 %v552, 32
    %v555 = vpop.permute.xlu0 %554
    %v557 = vmul.f32 %v539, %v555
    %559 = vrot.lane.b32.xlu0 %v557, 64
    %v560 = vpop.permute.xlu0 %559
    %v561 = vsel %vm152, %v560, 0
    %563 = vmatprep.subr.mxu0 0.0
    %564 = vmatpush1.msra.mxu0 %v39
    %565 = vmatprep.subr.mxu0 0.0
    %566 = vmatpush1.msra.mxu0 %v40
    %567 = vmatprep.subr.mxu0 0.0
    %568 = vmatpush1.msra.mxu0 %v41
    %569 = vmatprep.subr.mxu0 0.0
    %570 = vmatpush1.msra.mxu0 %v42
    %571 = vmatprep.subr.mxu0 0.0
    %572 = vmatpush1.msra.mxu0 0.0
    %573 = vmatprep.subr.mxu0 0.0
    %574 = vmatpush1.msra.mxu0 0.0
    %575 = vmatprep.subr.mxu0 0.0
    %576 = vmatpush1.msra.mxu0 0.0
    %577 = vmatprep.subr.mxu0 0.0
    %578 = vmatpush1.msra.mxu0 0.0
    %579 = vmatprep.subr.mxu0 0.0
    %580 = vmatpush1.msra.mxu0 0.0
    %581 = vmatprep.subr.mxu0 0.0
    %582 = vmatpush1.msra.mxu0 0.0
    %583 = vmatprep.subr.mxu0 0.0
    %584 = vmatpush1.msra.mxu0 0.0
    %585 = vmatprep.subr.mxu0 0.0
    %586 = vmatpush1.msra.mxu0 0.0
    %587 = vmatprep.subr.mxu0 0.0
    %588 = vmatpush1.msra.mxu0 0.0
    %589 = vmatprep.subr.mxu0 0.0
    %590 = vmatpush1.msra.mxu0 0.0
    %591 = vmatprep.subr.mxu0 0.0
    %592 = vmatpush1.msra.mxu0 0.0
    %593 = vmatprep.subr.mxu0 0.0
    %594 = vmatpush1.msra.mxu0 0.0
    %595 = vmatprep.subr.mxu0 0.0
    %596 = vmatpush1.msra.mxu0 0.0
    %597 = vmatprep.subr.mxu0 0.0
    %598 = vmatpush1.msra.mxu0 0.0
    %599 = vmatprep.subr.mxu0 0.0
    %600 = vmatpush1.msra.mxu0 0.0
    %601 = vmatprep.subr.mxu0 0.0
    %602 = vmatpush1.msra.mxu0 0.0
    %603 = vmatprep.subr.mxu0 0.0
    %604 = vmatpush1.msra.mxu0 0.0
    %605 = vmatprep.subr.mxu0 0.0
    %606 = vmatpush1.msra.mxu0 0.0
    %607 = vmatprep.subr.mxu0 0.0
    %608 = vmatpush1.msra.mxu0 0.0
    %609 = vmatprep.subr.mxu0 0.0
    %610 = vmatpush1.msra.mxu0 0.0
    %611 = vmatprep.subr.mxu0 0.0
    %612 = vmatpush1.msra.mxu0 0.0
    %613 = vmatprep.subr.mxu0 0.0
    %614 = vmatpush1.msra.mxu0 0.0
    %615 = vmatprep.subr.mxu0 0.0
    %616 = vmatpush1.msra.mxu0 0.0
    %617 = vmatprep.subr.mxu0 0.0
    %618 = vmatpush1.msra.mxu0 0.0
    %619 = vmatprep.subr.mxu0 0.0
    %620 = vmatpush1.msra.mxu0 0.0
    %621 = vmatprep.subr.mxu0 0.0
    %622 = vmatpush1.msra.mxu0 0.0
    %623 = vmatprep.subr.mxu0 0.0
    %624 = vmatpush1.msra.mxu0 0.0
    %625 = vmatprep.subr.mxu0 0.0
    %626 = vmatpush1.msra.mxu0 0.0
    %627 = vmatprep.mubr.f32.mxu0 0.0
    %628 = vmatmul.mubr.f32.gmra.mrb[0].mxu0 %v561
    %v629 = vpop.f32.mrb[0].mxu0
    %v630 = vadd.f32 %v147, %v629
    %v631 = vpop.f32.mrb[0].mxu0
    %632 = vdwg.mxu0
    %v633 = vxor.u32 %v630, 2147483648
    %v634 = vmul.f32 %v633, 1.442695
    %v635 = vpow.pop %v634
    %v636 = vadd.f32 %v635, 1.0
    %v637 = vrcp.pop %v636
    %v638 = vmul.f32 1.0, %v637
    %v639 = vtanh.pop %v630
    %v640 = vmul.f32 %v638, %v551
    %642 = vrot.lane.b32.xlu0 %v639, 32
    %v643 = vpop.permute.xlu0 %642
    %v645 = vmul.f32 %v638, %v643
    %647 = vrot.lane.b32.xlu0 %v645, 32
    %v648 = vpop.permute.xlu0 %647
    %v650 = vadd.f32 %v640, %v648
    %v651 = vtanh.pop %v650
    %653 = vrot.lane.b32.xlu0 %v651, 32
    %v654 = vpop.permute.xlu0 %653
    %v656 = vmul.f32 %v638, %v654
    %658 = vrot.lane.b32.xlu0 %v656, 64
    %v659 = vpop.permute.xlu0 %658
    %v661 = vrot.slane %v147, 2
    %v663 = vsel %vm152, %v659, 0
    %665 = vmatprep.subr.mxu0 0.0
    %666 = vmatpush1.msra.mxu0 %v39
    %667 = vmatprep.subr.mxu0 0.0
    %668 = vmatpush1.msra.mxu0 %v40
    %669 = vmatprep.subr.mxu0 0.0
    %670 = vmatpush1.msra.mxu0 %v41
    %671 = vmatprep.subr.mxu0 0.0
    %672 = vmatpush1.msra.mxu0 %v42
    %673 = vmatprep.subr.mxu0 0.0
    %674 = vmatpush1.msra.mxu0 0.0
    %675 = vmatprep.subr.mxu0 0.0
    %676 = vmatpush1.msra.mxu0 0.0
    %677 = vmatprep.subr.mxu0 0.0
    %678 = vmatpush1.msra.mxu0 0.0
    %679 = vmatprep.subr.mxu0 0.0
    %680 = vmatpush1.msra.mxu0 0.0
    %681 = vmatprep.subr.mxu0 0.0
    %682 = vmatpush1.msra.mxu0 0.0
    %683 = vmatprep.subr.mxu0 0.0
    %684 = vmatpush1.msra.mxu0 0.0
    %685 = vmatprep.subr.mxu0 0.0
    %686 = vmatpush1.msra.mxu0 0.0
    %687 = vmatprep.subr.mxu0 0.0
    %688 = vmatpush1.msra.mxu0 0.0
    %689 = vmatprep.subr.mxu0 0.0
    %690 = vmatpush1.msra.mxu0 0.0
    %691 = vmatprep.subr.mxu0 0.0
    %692 = vmatpush1.msra.mxu0 0.0
    %693 = vmatprep.subr.mxu0 0.0
    %694 = vmatpush1.msra.mxu0 0.0
    %695 = vmatprep.subr.mxu0 0.0
    %696 = vmatpush1.msra.mxu0 0.0
    %697 = vmatprep.subr.mxu0 0.0
    %698 = vmatpush1.msra.mxu0 0.0
    %699 = vmatprep.subr.mxu0 0.0
    %700 = vmatpush1.msra.mxu0 0.0
    %701 = vmatprep.subr.mxu0 0.0
    %702 = vmatpush1.msra.mxu0 0.0
    %703 = vmatprep.subr.mxu0 0.0
    %704 = vmatpush1.msra.mxu0 0.0
    %705 = vmatprep.subr.mxu0 0.0
    %706 = vmatpush1.msra.mxu0 0.0
    %707 = vmatprep.subr.mxu0 0.0
    %708 = vmatpush1.msra.mxu0 0.0
    %709 = vmatprep.subr.mxu0 0.0
    %710 = vmatpush1.msra.mxu0 0.0
    %711 = vmatprep.subr.mxu0 0.0
    %712 = vmatpush1.msra.mxu0 0.0
    %713 = vmatprep.subr.mxu0 0.0
    %714 = vmatpush1.msra.mxu0 0.0
    %715 = vmatprep.subr.mxu0 0.0
    %716 = vmatpush1.msra.mxu0 0.0
    %717 = vmatprep.subr.mxu0 0.0
    %718 = vmatpush1.msra.mxu0 0.0
    %719 = vmatprep.subr.mxu0 0.0
    %720 = vmatpush1.msra.mxu0 0.0
    %721 = vmatprep.subr.mxu0 0.0
    %722 = vmatpush1.msra.mxu0 0.0
    %723 = vmatprep.subr.mxu0 0.0
    %724 = vmatpush1.msra.mxu0 0.0
    %725 = vmatprep.subr.mxu0 0.0
    %726 = vmatpush1.msra.mxu0 0.0
    %727 = vmatprep.subr.mxu0 0.0
    %728 = vmatpush1.msra.mxu0 0.0
    %729 = vmatprep.mubr.f32.mxu0 0.0
    %730 = vmatmul.mubr.f32.gmra.mrb[0].mxu0 %v663
    %v731 = vpop.f32.mrb[0].mxu0
    %v732 = vadd.f32 %v661, %v731
    %v733 = vpop.f32.mrb[0].mxu0
    %734 = vdwg.mxu0
    %v735 = vxor.u32 %v732, 2147483648
    %v736 = vmul.f32 %v735, 1.442695
    %v737 = vpow.pop %v736
    %v738 = vadd.f32 %v737, 1.0
    %v739 = vrcp.pop %v738
    %v740 = vmul.f32 1.0, %v739
    %v741 = vtanh.pop %v732
    %v742 = vmul.f32 %v740, %v650
    %744 = vrot.lane.b32.xlu0 %v741, 32
    %v745 = vpop.permute.xlu0 %744
    %v747 = vmul.f32 %v740, %v745
    %749 = vrot.lane.b32.xlu0 %v747, 32
    %v750 = vpop.permute.xlu0 %749
    %v752 = vadd.f32 %v742, %v750
    %v753 = vtanh.pop %v752
    %755 = vrot.lane.b32.xlu0 %v753, 32
    %v756 = vpop.permute.xlu0 %755
    %v758 = vmul.f32 %v740, %v756
    %760 = vrot.lane.b32.xlu0 %v758, 64
    %v761 = vpop.permute.xlu0 %760
    %v762 = vrot.slane %v147, 4
    %v764 = vsel %vm152, %v761, 0
    %766 = vmatprep.subr.mxu0 0.0
    %767 = vmatpush1.msra.mxu0 %v39
    %768 = vmatprep.subr.mxu0 0.0
    %769 = vmatpush1.msra.mxu0 %v40
    %770 = vmatprep.subr.mxu0 0.0
    %771 = vmatpush1.msra.mxu0 %v41
    %772 = vmatprep.subr.mxu0 0.0
    %773 = vmatpush1.msra.mxu0 %v42
    %774 = vmatprep.subr.mxu0 0.0
    %775 = vmatpush1.msra.mxu0 0.0
    %776 = vmatprep.subr.mxu0 0.0
    %777 = vmatpush1.msra.mxu0 0.0
    %778 = vmatprep.subr.mxu0 0.0
    %779 = vmatpush1.msra.mxu0 0.0
    %780 = vmatprep.subr.mxu0 0.0
    %781 = vmatpush1.msra.mxu0 0.0
    %782 = vmatprep.subr.mxu0 0.0
    %783 = vmatpush1.msra.mxu0 0.0
    %784 = vmatprep.subr.mxu0 0.0
    %785 = vmatpush1.msra.mxu0 0.0
    %786 = vmatprep.subr.mxu0 0.0
    %787 = vmatpush1.msra.mxu0 0.0
    %788 = vmatprep.subr.mxu0 0.0
    %789 = vmatpush1.msra.mxu0 0.0
    %790 = vmatprep.subr.mxu0 0.0
    %791 = vmatpush1.msra.mxu0 0.0
    %792 = vmatprep.subr.mxu0 0.0
    %793 = vmatpush1.msra.mxu0 0.0
    %794 = vmatprep.subr.mxu0 0.0
    %795 = vmatpush1.msra.mxu0 0.0
    %796 = vmatprep.subr.mxu0 0.0
    %797 = vmatpush1.msra.mxu0 0.0
    %798 = vmatprep.subr.mxu0 0.0
    %799 = vmatpush1.msra.mxu0 0.0
    %800 = vmatprep.subr.mxu0 0.0
    %801 = vmatpush1.msra.mxu0 0.0
    %802 = vmatprep.subr.mxu0 0.0
    %803 = vmatpush1.msra.mxu0 0.0
    %804 = vmatprep.subr.mxu0 0.0
    %805 = vmatpush1.msra.mxu0 0.0
    %806 = vmatprep.subr.mxu0 0.0
    %807 = vmatpush1.msra.mxu0 0.0
    %808 = vmatprep.subr.mxu0 0.0
    %809 = vmatpush1.msra.mxu0 0.0
    %810 = vmatprep.subr.mxu0 0.0
    %811 = vmatpush1.msra.mxu0 0.0
    %812 = vmatprep.subr.mxu0 0.0
    %813 = vmatpush1.msra.mxu0 0.0
    %814 = vmatprep.subr.mxu0 0.0
    %815 = vmatpush1.msra.mxu0 0.0
    %816 = vmatprep.subr.mxu0 0.0
    %817 = vmatpush1.msra.mxu0 0.0
    %818 = vmatprep.subr.mxu0 0.0
    %819 = vmatpush1.msra.mxu0 0.0
    %820 = vmatprep.subr.mxu0 0.0
    %821 = vmatpush1.msra.mxu0 0.0
    %822 = vmatprep.subr.mxu0 0.0
    %823 = vmatpush1.msra.mxu0 0.0
    %824 = vmatprep.subr.mxu0 0.0
    %825 = vmatpush1.msra.mxu0 0.0
    %826 = vmatprep.subr.mxu0 0.0
    %827 = vmatpush1.msra.mxu0 0.0
    %828 = vmatprep.subr.mxu0 0.0
    %829 = vmatpush1.msra.mxu0 0.0
    %830 = vmatprep.mubr.f32.mxu0 0.0
    %831 = vmatmul.mubr.f32.gmra.mrb[0].mxu0 %v764
    %v832 = vpop.f32.mrb[0].mxu0
    %v833 = vadd.f32 %v762, %v832
    %v834 = vpop.f32.mrb[0].mxu0
    %835 = vdwg.mxu0
    %v836 = vxor.u32 %v833, 2147483648
    %v837 = vmul.f32 %v836, 1.442695
    %v838 = vpow.pop %v837
    %v839 = vadd.f32 %v838, 1.0
    %v840 = vrcp.pop %v839
    %v841 = vmul.f32 1.0, %v840
    %v842 = vtanh.pop %v833
    %v843 = vmul.f32 %v841, %v752
    %845 = vrot.lane.b32.xlu0 %v842, 32
    %v846 = vpop.permute.xlu0 %845
    %v848 = vmul.f32 %v841, %v846
    %850 = vrot.lane.b32.xlu0 %v848, 32
    %v851 = vpop.permute.xlu0 %850
    %v853 = vadd.f32 %v843, %v851
    %v854 = vtanh.pop %v853
    %856 = vrot.lane.b32.xlu0 %v854, 32
    %v857 = vpop.permute.xlu0 %856
    %v859 = vmul.f32 %v841, %v857
    %861 = vrot.lane.b32.xlu0 %v859, 64
    %v862 = vpop.permute.xlu0 %861
    %v863 = vrot.slane %v147, 6
    %v865 = vsel %vm152, %v862, 0
    %867 = vmatprep.subr.mxu0 0.0
    %868 = vmatpush1.msra.mxu0 %v39
    %869 = vmatprep.subr.mxu0 0.0
    %870 = vmatpush1.msra.mxu0 %v40
    %871 = vmatprep.subr.mxu0 0.0
    %872 = vmatpush1.msra.mxu0 %v41
    %873 = vmatprep.subr.mxu0 0.0
    %874 = vmatpush1.msra.mxu0 %v42
    %875 = vmatprep.subr.mxu0 0.0
    %876 = vmatpush1.msra.mxu0 0.0
    %877 = vmatprep.subr.mxu0 0.0
    %878 = vmatpush1.msra.mxu0 0.0
    %879 = vmatprep.subr.mxu0 0.0
    %880 = vmatpush1.msra.mxu0 0.0
    %881 = vmatprep.subr.mxu0 0.0
    %882 = vmatpush1.msra.mxu0 0.0
    %883 = vmatprep.subr.mxu0 0.0
    %884 = vmatpush1.msra.mxu0 0.0
    %885 = vmatprep.subr.mxu0 0.0
    %886 = vmatpush1.msra.mxu0 0.0
    %887 = vmatprep.subr.mxu0 0.0
    %888 = vmatpush1.msra.mxu0 0.0
    %889 = vmatprep.subr.mxu0 0.0
    %890 = vmatpush1.msra.mxu0 0.0
    %891 = vmatprep.subr.mxu0 0.0
    %892 = vmatpush1.msra.mxu0 0.0
    %893 = vmatprep.subr.mxu0 0.0
    %894 = vmatpush1.msra.mxu0 0.0
    %895 = vmatprep.subr.mxu0 0.0
    %896 = vmatpush1.msra.mxu0 0.0
    %897 = vmatprep.subr.mxu0 0.0
    %898 = vmatpush1.msra.mxu0 0.0
    %899 = vmatprep.subr.mxu0 0.0
    %900 = vmatpush1.msra.mxu0 0.0
    %901 = vmatprep.subr.mxu0 0.0
    %902 = vmatpush1.msra.mxu0 0.0
    %903 = vmatprep.subr.mxu0 0.0
    %904 = vmatpush1.msra.mxu0 0.0
    %905 = vmatprep.subr.mxu0 0.0
    %906 = vmatpush1.msra.mxu0 0.0
    %907 = vmatprep.subr.mxu0 0.0
    %908 = vmatpush1.msra.mxu0 0.0
    %909 = vmatprep.subr.mxu0 0.0
    %910 = vmatpush1.msra.mxu0 0.0
    %911 = vmatprep.subr.mxu0 0.0
    %912 = vmatpush1.msra.mxu0 0.0
    %913 = vmatprep.subr.mxu0 0.0
    %914 = vmatpush1.msra.mxu0 0.0
    %915 = vmatprep.subr.mxu0 0.0
    %916 = vmatpush1.msra.mxu0 0.0
    %917 = vmatprep.subr.mxu0 0.0
    %918 = vmatpush1.msra.mxu0 0.0
    %919 = vmatprep.subr.mxu0 0.0
    %920 = vmatpush1.msra.mxu0 0.0
    %921 = vmatprep.subr.mxu0 0.0
    %922 = vmatpush1.msra.mxu0 0.0
    %923 = vmatprep.subr.mxu0 0.0
    %924 = vmatpush1.msra.mxu0 0.0
    %925 = vmatprep.subr.mxu0 0.0
    %926 = vmatpush1.msra.mxu0 0.0
    %927 = vmatprep.subr.mxu0 0.0
    %928 = vmatpush1.msra.mxu0 0.0
    %929 = vmatprep.subr.mxu0 0.0
    %930 = vmatpush1.msra.mxu0 0.0
    %931 = vmatprep.mubr.f32.mxu0 0.0
    %932 = vmatmul.mubr.f32.gmra.mrb[0].mxu0 %v865
    %v933 = vpop.f32.mrb[0].mxu0
    %v934 = vadd.f32 %v863, %v933
    %v935 = vpop.f32.mrb[0].mxu0
    %936 = vdwg.mxu0
    %v937 = vxor.u32 %v934, 2147483648
    %v938 = vmul.f32 %v937, 1.442695
    %v939 = vpow.pop %v938
    %v940 = vadd.f32 %v939, 1.0
    %v941 = vrcp.pop %v940
    %v942 = vmul.f32 1.0, %v941
    %v943 = vtanh.pop %v934
    %v944 = vmul.f32 %v942, %v853
    %946 = vrot.lane.b32.xlu0 %v943, 32
    %v947 = vpop.permute.xlu0 %946
    %v949 = vmul.f32 %v942, %v947
    %951 = vrot.lane.b32.xlu0 %v949, 32
    %v952 = vpop.permute.xlu0 %951
    %v954 = vadd.f32 %v944, %v952
    %v955 = vtanh.pop %v954
    %957 = vrot.lane.b32.xlu0 %v955, 32
    %v958 = vpop.permute.xlu0 %957
    %v960 = vmul.f32 %v942, %v958
    %v962 = vrot.slane %v960, 1
    %963 = vrot.lane.b32.xlu0 %v962, 64
    %v964 = vpop.permute.xlu0 %963
    %v965 = vsel %vm152, %v964, 0
    %967 = vmatprep.subr.mxu0 0.0
    %968 = vmatpush1.msra.mxu0 %v47
    %969 = vmatprep.subr.mxu0 0.0
    %970 = vmatpush1.msra.mxu0 %v48
    %971 = vmatprep.subr.mxu0 0.0
    %972 = vmatpush1.msra.mxu0 %v49
    %973 = vmatprep.subr.mxu0 0.0
    %974 = vmatpush1.msra.mxu0 %v50
    %975 = vmatprep.subr.mxu0 0.0
    %976 = vmatpush1.msra.mxu0 0.0
    %977 = vmatprep.subr.mxu0 0.0
    %978 = vmatpush1.msra.mxu0 0.0
    %979 = vmatprep.subr.mxu0 0.0
    %980 = vmatpush1.msra.mxu0 0.0
    %981 = vmatprep.subr.mxu0 0.0
    %982 = vmatpush1.msra.mxu0 0.0
    %983 = vmatprep.subr.mxu0 0.0
    %984 = vmatpush1.msra.mxu0 0.0
    %985 = vmatprep.subr.mxu0 0.0
    %986 = vmatpush1.msra.mxu0 0.0
    %987 = vmatprep.subr.mxu0 0.0
    %988 = vmatpush1.msra.mxu0 0.0
    %989 = vmatprep.subr.mxu0 0.0
    %990 = vmatpush1.msra.mxu0 0.0
    %991 = vmatprep.subr.mxu0 0.0
    %992 = vmatpush1.msra.mxu0 0.0
    %993 = vmatprep.subr.mxu0 0.0
    %994 = vmatpush1.msra.mxu0 0.0
    %995 = vmatprep.subr.mxu0 0.0
    %996 = vmatpush1.msra.mxu0 0.0
    %997 = vmatprep.subr.mxu0 0.0
    %998 = vmatpush1.msra.mxu0 0.0
    %999 = vmatprep.subr.mxu0 0.0
    %1000 = vmatpush1.msra.mxu0 0.0
    %1001 = vmatprep.subr.mxu0 0.0
    %1002 = vmatpush1.msra.mxu0 0.0
    %1003 = vmatprep.subr.mxu0 0.0
    %1004 = vmatpush1.msra.mxu0 0.0
    %1005 = vmatprep.subr.mxu0 0.0
    %1006 = vmatpush1.msra.mxu0 0.0
    %1007 = vmatprep.subr.mxu0 0.0
    %1008 = vmatpush1.msra.mxu0 0.0
    %1009 = vmatprep.subr.mxu0 0.0
    %1010 = vmatpush1.msra.mxu0 0.0
    %1011 = vmatprep.subr.mxu0 0.0
    %1012 = vmatpush1.msra.mxu0 0.0
    %1013 = vmatprep.subr.mxu0 0.0
    %1014 = vmatpush1.msra.mxu0 0.0
    %1015 = vmatprep.subr.mxu0 0.0
    %1016 = vmatpush1.msra.mxu0 0.0
    %1017 = vmatprep.subr.mxu0 0.0
    %1018 = vmatpush1.msra.mxu0 0.0
    %1019 = vmatprep.subr.mxu0 0.0
    %1020 = vmatpush1.msra.mxu0 0.0
    %1021 = vmatprep.subr.mxu0 0.0
    %1022 = vmatpush1.msra.mxu0 0.0
    %1023 = vmatprep.subr.mxu0 0.0
    %1024 = vmatpush1.msra.mxu0 0.0
    %1025 = vmatprep.subr.mxu0 0.0
    %1026 = vmatpush1.msra.mxu0 0.0
    %1027 = vmatprep.subr.mxu0 0.0
    %1028 = vmatpush1.msra.mxu0 0.0
    %1029 = vmatprep.subr.mxu0 0.0
    %1030 = vmatpush1.msra.mxu0 0.0
    %1031 = vmatprep.mubr.f32.mxu0 0.0
    %1032 = vmatmul.mubr.f32.gmra.mrb[0].mxu0 %v965
    %v1033 = vpop.f32.mrb[0].mxu0
    %v1034 = vadd.f32 0.0, %v1033
    %v1035 = vpop.f32.mrb[0].mxu0
    %1036 = vdwg.mxu0
    %1037 = vrot.lane.b32.xlu0 %v960, 64
    %v1038 = vpop.permute.xlu0 %1037
    %v1039 = vsel %vm152, %v1038, 0
    %1041 = vmatprep.subr.mxu0 0.0
    %1042 = vmatpush1.msra.mxu0 %v43
    %1043 = vmatprep.subr.mxu0 0.0
    %1044 = vmatpush1.msra.mxu0 %v44
    %1045 = vmatprep.subr.mxu0 0.0
    %1046 = vmatpush1.msra.mxu0 %v45
    %1047 = vmatprep.subr.mxu0 0.0
    %1048 = vmatpush1.msra.mxu0 %v46
    %1049 = vmatprep.subr.mxu0 0.0
    %1050 = vmatpush1.msra.mxu0 0.0
    %1051 = vmatprep.subr.mxu0 0.0
    %1052 = vmatpush1.msra.mxu0 0.0
    %1053 = vmatprep.subr.mxu0 0.0
    %1054 = vmatpush1.msra.mxu0 0.0
    %1055 = vmatprep.subr.mxu0 0.0
    %1056 = vmatpush1.msra.mxu0 0.0
    %1057 = vmatprep.subr.mxu0 0.0
    %1058 = vmatpush1.msra.mxu0 0.0
    %1059 = vmatprep.subr.mxu0 0.0
    %1060 = vmatpush1.msra.mxu0 0.0
    %1061 = vmatprep.subr.mxu0 0.0
    %1062 = vmatpush1.msra.mxu0 0.0
    %1063 = vmatprep.subr.mxu0 0.0
    %1064 = vmatpush1.msra.mxu0 0.0
    %1065 = vmatprep.subr.mxu0 0.0
    %1066 = vmatpush1.msra.mxu0 0.0
    %1067 = vmatprep.subr.mxu0 0.0
    %1068 = vmatpush1.msra.mxu0 0.0
    %1069 = vmatprep.subr.mxu0 0.0
    %1070 = vmatpush1.msra.mxu0 0.0
    %1071 = vmatprep.subr.mxu0 0.0
    %1072 = vmatpush1.msra.mxu0 0.0
    %1073 = vmatprep.subr.mxu0 0.0
    %1074 = vmatpush1.msra.mxu0 0.0
    %1075 = vmatprep.subr.mxu0 0.0
    %1076 = vmatpush1.msra.mxu0 0.0
    %1077 = vmatprep.subr.mxu0 0.0
    %1078 = vmatpush1.msra.mxu0 0.0
    %1079 = vmatprep.subr.mxu0 0.0
    %1080 = vmatpush1.msra.mxu0 0.0
    %1081 = vmatprep.subr.mxu0 0.0
    %1082 = vmatpush1.msra.mxu0 0.0
    %1083 = vmatprep.subr.mxu0 0.0
    %1084 = vmatpush1.msra.mxu0 0.0
    %1085 = vmatprep.subr.mxu0 0.0
    %1086 = vmatpush1.msra.mxu0 0.0
    %1087 = vmatprep.subr.mxu0 0.0
    %1088 = vmatpush1.msra.mxu0 0.0
    %1089 = vmatprep.subr.mxu0 0.0
    %1090 = vmatpush1.msra.mxu0 0.0
    %1091 = vmatprep.subr.mxu0 0.0
    %1092 = vmatpush1.msra.mxu0 0.0
    %1093 = vmatprep.subr.mxu0 0.0
    %1094 = vmatpush1.msra.mxu0 0.0
    %1095 = vmatprep.subr.mxu0 0.0
    %1096 = vmatpush1.msra.mxu0 0.0
    %1097 = vmatprep.subr.mxu0 0.0
    %1098 = vmatpush1.msra.mxu0 0.0
    %1099 = vmatprep.subr.mxu0 0.0
    %1100 = vmatpush1.msra.mxu0 0.0
    %1101 = vmatprep.subr.mxu0 0.0
    %1102 = vmatpush1.msra.mxu0 0.0
    %1103 = vmatprep.subr.mxu0 0.0
    %1104 = vmatpush1.msra.mxu0 0.0
    %1105 = vmatprep.mubr.f32.mxu0 0.0
    %1106 = vmatmul.mubr.f32.gmra.mrb[0].mxu0 %v1039
    %v1107 = vpop.f32.mrb[0].mxu0
    %v1108 = vadd.f32 %v1034, %v1107
    %v1109 = vpop.f32.mrb[0].mxu0
    %1110 = vdwg.mxu0
    %v1111 = vadd.f32 %v1108, %v51
    %1112 = vst [vmem:[%s4] sm:$0x1] %v1111
    // Predicated region
    $region22: #{siamese_forward.1} parent=1 // pred_check
      _
    $region23: #{siamese_forward.1} parent=1 // pred_check_branch
      %1114 = sbr.rel (0) target = $region25
    $region24: #{siamese_forward.1} parent=1 // pred_region
      _
    $region25: #{siamese_forward.1} parent=1 // pred_fallthru
      _
    // Predicated region
    $region26: #{siamese_forward.1} parent=1 // pred_check
      _
    $region27: #{siamese_forward.1} parent=1 // pred_check_branch
      %1116 = sbr.rel (0) target = $region29
    $region28: #{siamese_forward.1} parent=1 // pred_region
      _
    $region29: #{siamese_forward.1} parent=1 // pred_fallthru
      _
    %1117 = vsyncpa [#allocation3], 1

</llo_original>
